<compile_context>
chip_gen: v7x
topology: tpu7x:2x2x1
jax: 0.10.0
libtpu: 0.0.40
codegen_flags: <defaults>
</compile_context>

<pallas_src>
import jax
import jax.numpy as jnp
from jax.experimental import pallas as pl
from jax.experimental.pallas import tpu as pltpu


def _pick_tile(n, target, align):
    """Largest tile t with t <= target, t % align == 0 and n % t == 0.
    Falls back to the full axis (t == n) when no such tile exists."""
    if n <= target:
        return n
    t = (min(target, n) // align) * align
    while t >= align:
        if n % t == 0:
            return t
        t -= align
    return n


def mean_pool_kernel(h_ref, m_ref, inv_ref, o_ref, acc_ref):
    # h_ref  : (TB, TS, H)  native-dtype block of last_hidden_state
    # m_ref  : (TB, 1, TS)  f32 attention-mask block (lane-dense over TS)
    # inv_ref: (TB, 1, 1)   f32 precomputed 1 / clamp(sum(mask), 1e-9)
    # o_ref  : (TB, 1, H)   f32 output block (written on the last S-tile)
    # acc_ref: (TB, 1, H)   f32 accumulator scratch (resident across S axis)
    k = pl.program_id(1)

    @pl.when(k == 0)
    def _init():
        acc_ref[...] = jnp.zeros_like(acc_ref)

    h = h_ref[...].astype(jnp.float32)          # (TB, TS, H) f32
    m = m_ref[...]                              # (TB, 1, TS) f32
    # Masked partial sum over this sequence tile, on the MXU.
    acc_ref[...] += jnp.einsum(
        "bqs,bsh->bqh", m, h,
        preferred_element_type=jnp.float32,
        precision=jax.lax.Precision.HIGHEST,
    )

    @pl.when(k == pl.num_programs(1) - 1)
    def _finalize():
        o_ref[...] = acc_ref[...] * inv_ref[...]


def mean_pooling(last_hidden_state, attention_mask, *, tb=None, ts=None,
                 block_bytes=4 * 1024 * 1024):
    """Pallas equivalent of MeanPooling.forward; returns float32 (B, H)."""
    B, S, H = last_hidden_state.shape
    itemsize = jnp.dtype(last_hidden_state.dtype).itemsize

    # Tile selection: TB is a leading (untiled) block dim -> any divisor of B;
    # TS sits on the lane axis of the mask block -> multiple of 128 (or S).
    if tb is None:
        tb = _pick_tile(B, 8, 1)
    if ts is None:
        ts_target = max(128, block_bytes // max(1, tb * H * itemsize))
        ts = _pick_tile(S, ts_target, 128)
    assert B % tb == 0 and S % ts == 0, (B, S, tb, ts)

    mask_f = attention_mask.astype(jnp.float32)                        # (B, S)
    inv_denom = 1.0 / jnp.maximum(jnp.sum(mask_f, axis=1), 1e-9)       # (B,)
    mask3 = mask_f.reshape(B, 1, S)
    inv3 = inv_denom.reshape(B, 1, 1)

    grid = (B // tb, S // ts)

    out = pl.pallas_call(
        mean_pool_kernel,
        out_shape=jax.ShapeDtypeStruct((B, 1, H), jnp.float32),
        grid_spec=pltpu.PrefetchScalarGridSpec(
            num_scalar_prefetch=0,
            grid=grid,
            in_specs=[
                pl.BlockSpec((tb, ts, H), lambda i, k: (i, k, 0)),   # hidden
                pl.BlockSpec((tb, 1, ts), lambda i, k: (i, 0, k)),   # mask
                pl.BlockSpec((tb, 1, 1), lambda i, k: (i, 0, 0)),    # 1/denom
            ],
            out_specs=pl.BlockSpec((tb, 1, H), lambda i, k: (i, 0, 0)),
            scratch_shapes=[pltpu.VMEM((tb, 1, H), jnp.float32)],
        ),
        compiler_params=pltpu.CompilerParams(
            dimension_semantics=("parallel", "arbitrary"),
            vmem_limit_bytes=48 * 1024 * 1024,
        ),
        cost_estimate=pl.CostEstimate(
            flops=2 * B * S * H,
            transcendentals=0,
            bytes_accessed=(last_hidden_state.size * itemsize
                            + mask3.size * 4 + inv3.size * 4 + B * H * 4),
        ),
    )(last_hidden_state, mask3, inv3)

    return out.reshape(B, H)


def mean_pooling_ref(last_hidden_state, attention_mask):
    """Pure-JAX reference mirroring the PyTorch forward exactly (f32 math)."""
    h = last_hidden_state.astype(jnp.float32)
    m = attention_mask[..., None].astype(jnp.float32)
    m = jnp.broadcast_to(m, h.shape)
    sum_emb = jnp.sum(h * m, axis=1)
    sum_mask = jnp.clip(jnp.sum(m, axis=1), 1e-9, None)
    return sum_emb / sum_mask


if __name__ == "__main__":
    key = jax.random.PRNGKey(0)
    k1, k2, k3, k4 = jax.random.split(key, 4)

    # Test 1: tiny f32 shapes (B=2, S=8, H=32), single grid step.
    # Values are rounded through bf16 so the check is tight regardless of the
    # MXU pass count used for the f32 contraction.
    B, S, H = 2, 8, 32
    h1 = jax.random.normal(k1, (B, S, H), dtype=jnp.float32)
    h1 = h1.astype(jnp.bfloat16).astype(jnp.float32)
    m1 = (jax.random.uniform(k2, (B, S)) > 0.3).astype(jnp.int32)
    out1 = jax.block_until_ready(mean_pooling(h1, m1))
    ref1 = mean_pooling_ref(h1, m1)
    assert out1.shape == (B, H)
    assert jnp.allclose(out1, ref1, atol=1e-4, rtol=1e-4), "mismatch (test 1)"

    # Test 2: bf16 activations streamed natively, sequence axis tiled (ts=128
    # -> 2 reduction steps) to exercise the accumulator init/finalize path.
    B2, S2, H2 = 8, 256, 128
    h2 = jax.random.normal(k3, (B2, S2, H2), dtype=jnp.float32).astype(jnp.bfloat16)
    m2 = (jax.random.uniform(k4, (B2, S2)) > 0.25).astype(jnp.int32)
    out2 = jax.block_until_ready(mean_pooling(h2, m2, ts=128))
    ref2 = mean_pooling_ref(h2, m2)
    assert out2.shape == (B2, H2)
    assert jnp.allclose(out2, ref2, atol=1e-3, rtol=1e-3), "mismatch (test 2)"

    print("KERNEL_OK")
</pallas_src>

<mosaic_0001>
module attributes {stable_mosaic.version = 11 : i64} {
  func.func @mean_pool_kernel(%arg0: i32, %arg1: i32, %arg2: memref<2x8x32xf32, #tpu.memory_space<vmem>>, %arg3: memref<2x1x8xf32, #tpu.memory_space<vmem>>, %arg4: memref<2x1x1xf32, #tpu.memory_space<vmem>>, %arg5: memref<2x1x32xf32, #tpu.memory_space<vmem>>, %arg6: memref<2x1x32xf32, #tpu.memory_space<vmem>>) attributes {dimension_semantics = [#tpu.dimension_semantics<parallel>, #tpu.dimension_semantics<arbitrary>], iteration_bounds = array<i64: 1, 1>, scalar_prefetch = 0 : i64, scratch_operands = 1 : i64, tpu.core_type = #tpu.core_type<tc>, window_params = [{transform_indices = @transform_0, window_bounds = array<i64: 2, 8, 32>}, {transform_indices = @transform_1, window_bounds = array<i64: 2, 1, 8>}, {transform_indices = @transform_2, window_bounds = array<i64: 2, 1, 1>}, {transform_indices = @transform_3, window_bounds = array<i64: 2, 1, 32>}]} {
    %c0_i32 = arith.constant 0 : i32
    %0 = arith.cmpi eq, %arg1, %c0_i32 : i32
    %1 = arith.extui %0 : i1 to i32
    %c0_i32_0 = arith.constant 0 : i32
    %2 = arith.cmpi ne, %1, %c0_i32_0 : i32
    scf.if %2 {
      %cst_14 = arith.constant 0.000000e+00 : f32
      %12 = vector.broadcast %cst_14 : f32 to vector<2x1x32xf32>
      %c0_15 = arith.constant 0 : index
      %c0_16 = arith.constant 0 : index
      %c0_17 = arith.constant 0 : index
      %13 = vector.load %arg6[%c0_15, %c0_16, %c0_17] : memref<2x1x32xf32, #tpu.memory_space<vmem>>, vector<2x1x32xf32>
      tpu.vector_store %arg6[%c0_15, %c0_16, %c0_17], %12 {strides = array<i32>} : memref<2x1x32xf32, #tpu.memory_space<vmem>>, vector<2x1x32xf32>,
    } else {
    }
    %c0 = arith.constant 0 : index
    %c0_1 = arith.constant 0 : index
    %c0_2 = arith.constant 0 : index
    %3 = vector.load %arg2[%c0, %c0_1, %c0_2] : memref<2x8x32xf32, #tpu.memory_space<vmem>>, vector<2x8x32xf32>
    %c0_3 = arith.constant 0 : index
    %c0_4 = arith.constant 0 : index
    %c0_5 = arith.constant 0 : index
    %4 = vector.load %arg3[%c0_3, %c0_4, %c0_5] : memref<2x1x8xf32, #tpu.memory_space<vmem>>, vector<2x1x8xf32>
    %c0_6 = arith.constant 0 : index
    %c0_7 = arith.constant 0 : index
    %c0_8 = arith.constant 0 : index
    %5 = vector.load %arg6[%c0_6, %c0_7, %c0_8] : memref<2x1x32xf32, #tpu.memory_space<vmem>>, vector<2x1x32xf32>
    "tpu.trace_start"() <{level = 10 : i32, message = "bqs,bsh->bqh"}> : () -> ()
    %cst = arith.constant dense<0.000000e+00> : vector<2x1x32xf32>
    %6 = tpu.matmul %4, %3, %cst {dimension_numbers = #tpu.dot_dimension_numbers<[2], [1], [1], [2], [0, 0, 0, 1, 1, 2], [0], [0]>, precision = #tpu.contract_precision<fp32>} : vector<2x1x8xf32>, vector<2x8x32xf32>, vector<2x1x32xf32> -> vector<2x1x32xf32>
    "tpu.trace_stop"() : () -> ()
    %7 = arith.addf %5, %6 : vector<2x1x32xf32>
    %c0_9 = arith.constant 0 : index
    %c0_10 = arith.constant 0 : index
    %c0_11 = arith.constant 0 : index
    %8 = vector.load %arg6[%c0_9, %c0_10, %c0_11] : memref<2x1x32xf32, #tpu.memory_space<vmem>>, vector<2x1x32xf32>
    tpu.vector_store %arg6[%c0_9, %c0_10, %c0_11], %7 {strides = array<i32>} : memref<2x1x32xf32, #tpu.memory_space<vmem>>, vector<2x1x32xf32>,
    %c0_i32_12 = arith.constant 0 : i32
    %9 = arith.cmpi eq, %arg1, %c0_i32_12 : i32
    %10 = arith.extui %9 : i1 to i32
    %c0_i32_13 = arith.constant 0 : i32
    %11 = arith.cmpi ne, %10, %c0_i32_13 : i32
    scf.if %11 {
      %c0_14 = arith.constant 0 : index
      %c0_15 = arith.constant 0 : index
      %c0_16 = arith.constant 0 : index
      %12 = vector.load %arg6[%c0_14, %c0_15, %c0_16] : memref<2x1x32xf32, #tpu.memory_space<vmem>>, vector<2x1x32xf32>
      %c0_17 = arith.constant 0 : index
      %c0_18 = arith.constant 0 : index
      %c0_19 = arith.constant 0 : index
      %13 = vector.load %arg4[%c0_17, %c0_18, %c0_19] : memref<2x1x1xf32, #tpu.memory_space<vmem>>, vector<2x1x1xf32>
      %14 = vector.broadcast %13 : vector<2x1x1xf32> to vector<2x1x32xf32>
      %15 = arith.mulf %12, %14 : vector<2x1x32xf32>
      %c0_20 = arith.constant 0 : index
      %c0_21 = arith.constant 0 : index
      %c0_22 = arith.constant 0 : index
      %16 = vector.load %arg5[%c0_20, %c0_21, %c0_22] : memref<2x1x32xf32, #tpu.memory_space<vmem>>, vector<2x1x32xf32>
      tpu.vector_store %arg5[%c0_20, %c0_21, %c0_22], %15 {strides = array<i32>} : memref<2x1x32xf32, #tpu.memory_space<vmem>>, vector<2x1x32xf32>,
    } else {
    }
    return
  }
  func.func @transform_0(%arg0: i32, %arg1: i32) -> (i32, i32, i32) {
    %c0_i32 = arith.constant 0 : i32
    %c0_i32_0 = arith.constant 0 : i32
    return %arg0, %arg1, %c0_i32 : i32, i32, i32
  }
  func.func @transform_1(%arg0: i32, %arg1: i32) -> (i32, i32, i32) {
    %c0_i32 = arith.constant 0 : i32
    %c0_i32_0 = arith.constant 0 : i32
    return %arg0, %c0_i32, %arg1 : i32, i32, i32
  }
  func.func @transform_2(%arg0: i32, %arg1: i32) -> (i32, i32, i32) {
    %c0_i32 = arith.constant 0 : i32
    %c0_i32_0 = arith.constant 0 : i32
    %c0_i32_1 = arith.constant 0 : i32
    return %arg0, %c0_i32, %c0_i32_0 : i32, i32, i32
  }
  func.func @transform_3(%arg0: i32, %arg1: i32) -> (i32, i32, i32) {
    %c0_i32 = arith.constant 0 : i32
    %c0_i32_0 = arith.constant 0 : i32
    %c0_i32_1 = arith.constant 0 : i32
    return %arg0, %c0_i32, %c0_i32_0 : i32, i32, i32
  }
}

</mosaic_0001>

<llo_original>
// kernel: tpu_custom_call.1
$region0: #{tpu_custom_call.1}
  #allocation0 [shape = 'u32[]', space=smem, size = 0x4, offset = 0x4, fixed_abs, tag = 'smem constant byte address 0x4 - core index']
  #allocation1 [shape = 'u32[144,128]{1,0:T(1,128)}', space=vmem, size = 0x12000, scoped, tag = 'internal scratch']
  #allocation2 [shape = 'f32[2,1,32]{2,1,0:T(1,128)}', space=vmem, size = 0x400, scoped, tag = 'scratch operand']
  %s0 = inlined_call_operand.hbm [shape: f32[2,8,32], index: 0, kind: input, shape index: {}]
  %s1 = inlined_call_operand.vmem [shape: f32[2,1,8], index: 1, kind: input, shape index: {}]
  %s2 = inlined_call_operand.vmem [shape: f32[2,1,1], index: 2, kind: input, shape index: {}]
  %s3 = inlined_call_operand.hbm [shape: f32[2,1,32], index: 3, kind: output, shape index: {}]
  %s4 = sld [smem:[#allocation0]]
  $region34: #{tpu_custom_call.1} parent=0
    _
  %s6 = ssub.s32 1, %s4
  %s7 = scalar_select 0, %s6, %s4
  $region1: #{tpu_custom_call.1} parent=0
    #allocation3 [shape = 'u8[8192]{0}', space=vmem, size = 0x2000, scoped, tag = 'input window, operand 0, single buffered']
    #allocation4 [shape = 's32[1]{0}', space=sflag, size = 0x4, scoped, tag = 'scoped memory for tpu_custom_call.1']
    #allocation5 [shape = 's32[1]{0}', space=sflag, size = 0x4, scoped, tag = 'scoped memory for tpu_custom_call.1']
    #allocation6 [shape = 'u8[1024]{0}', space=vmem, size = 0x400, scoped, tag = 'output window, operand 0, single buffered']
    %8 = vsyncpa [#allocation4], 0
    %9 = vsyncpa [#allocation5], 0
    // Predicated region
    $region2: #{tpu_custom_call.1} parent=1 // pred_check
      _
    $region3: #{tpu_custom_call.1} parent=1 // pred_check_branch
      %11 = sbr.rel (0) target = $region5
    $region4: #{tpu_custom_call.1} parent=1 // pred_region
      %s13 = ssub.s32 256, 256
      %14 = vsyncadd [#allocation4], %s13
      %s15 = sshll.u32 [#allocation3], 4
      %s16 = int_to_ptr.vmem [resolvable:$true] %s15
      %21 = dma.hbm_to_vmem [thread:$0]  %s0, 256, %s16, [#allocation4], 128, 128, 8
    $region5: #{tpu_custom_call.1} parent=1 // pred_fallthru
      _
    // Predicated region
    $region6: #{tpu_custom_call.1} parent=1 // pred_check
      _
    $region7: #{tpu_custom_call.1} parent=1 // pred_check_branch
      %23 = sbr.rel (0) target = $region9
    $region8: #{tpu_custom_call.1} parent=1 // pred_region
      _
    $region9: #{tpu_custom_call.1} parent=1 // pred_fallthru
      _
    // Predicated region
    $region10: #{tpu_custom_call.1} parent=1 // pred_check
      _
    $region11: #{tpu_custom_call.1} parent=1 // pred_check_branch
      %25 = sbr.rel (0) target = $region13
    $region12: #{tpu_custom_call.1} parent=1 // pred_region
      _
    $region13: #{tpu_custom_call.1} parent=1 // pred_fallthru
      _
    // Predicated region
    $region14: #{tpu_custom_call.1} parent=1 // pred_check
      _
    $region15: #{tpu_custom_call.1} parent=1 // pred_check_branch
      %27 = sbr.rel (0) target = $region17
    $region16: #{tpu_custom_call.1} parent=1 // pred_region
      %28 = dma.done [#allocation4], 256
    $region17: #{tpu_custom_call.1} parent=1 // pred_fallthru
      _
    %p29 = scmp.eq.s32.totalorder 0, 0
    // Predicated region
    $region18: #{tpu_custom_call.1} parent=1 // pred_check
      %p30 = pneg %p29
    $region19: #{tpu_custom_call.1} parent=1 // pred_check_branch
      %32 = sbr.rel (%p30) target = $region21
    $region20: #{tpu_custom_call.1} parent=1 // pred_region
      %vm33 = vcmask 253952
      %34 = vst.msk [vmem:[#allocation2] sm:$0x1] %vm33, 0.0
      %35 = vst.msk [vmem:[#allocation2 + $0x1] sm:$0x1] %vm33, 0.0
    $region21: #{tpu_custom_call.1} parent=1 // pred_fallthru
      _
    %v36 = vld [vmem:[#allocation3] sm:$0xff]
    %v37 = vld [vmem:[#allocation3 + $0x8] sm:$0xff]
    %v38 = vld [vmem:[%s1] sm:$0x1]
    %v39 = vld [vmem:[%s1 + $0x1] sm:$0x1]
    %v40 = vld [vmem:[#allocation2] sm:$0x1]
    %v41 = vld [vmem:[#allocation2 + $0x1] sm:$0x1]
    %vm42 = vcmask 64512
    %v44 = vsel %vm42, %v38, 0
    %46 = vmatprep.subr.mxu0 0.0
    %v47 = vand.u32 %v36, 4294901760
    %48 = vmatpush1.msra.mxu0 %v47
    %49 = vmatprep.subr.mxu0 0.0
    %50 = vmatpush1.msra.mxu0 0.0
    %51 = vmatprep.subr.mxu0 0.0
    %52 = vmatpush1.msra.mxu0 0.0
    %53 = vmatprep.subr.mxu0 0.0
    %54 = vmatpush1.msra.mxu0 0.0
    %55 = vmatprep.subr.mxu0 0.0
    %56 = vmatpush1.msra.mxu0 0.0
    %57 = vmatprep.subr.mxu0 0.0
    %58 = vmatpush1.msra.mxu0 0.0
    %59 = vmatprep.subr.mxu0 0.0
    %60 = vmatpush1.msra.mxu0 0.0
    %61 = vmatprep.subr.mxu0 0.0
    %62 = vmatpush1.msra.mxu0 0.0
    %63 = vmatprep.subr.mxu0 0.0
    %64 = vmatpush1.msra.mxu0 0.0
    %65 = vmatprep.subr.mxu0 0.0
    %66 = vmatpush1.msra.mxu0 0.0
    %67 = vmatprep.subr.mxu0 0.0
    %68 = vmatpush1.msra.mxu0 0.0
    %69 = vmatprep.subr.mxu0 0.0
    %70 = vmatpush1.msra.mxu0 0.0
    %71 = vmatprep.subr.mxu0 0.0
    %72 = vmatpush1.msra.mxu0 0.0
    %73 = vmatprep.subr.mxu0 0.0
    %74 = vmatpush1.msra.mxu0 0.0
    %75 = vmatprep.subr.mxu0 0.0
    %76 = vmatpush1.msra.mxu0 0.0
    %77 = vmatprep.subr.mxu0 0.0
    %78 = vmatpush1.msra.mxu0 0.0
    %79 = vmatprep.subr.mxu0 0.0
    %80 = vmatpush1.msra.mxu0 0.0
    %81 = vmatprep.subr.mxu0 0.0
    %82 = vmatpush1.msra.mxu0 0.0
    %83 = vmatprep.subr.mxu0 0.0
    %84 = vmatpush1.msra.mxu0 0.0
    %85 = vmatprep.subr.mxu0 0.0
    %86 = vmatpush1.msra.mxu0 0.0
    %87 = vmatprep.subr.mxu0 0.0
    %88 = vmatpush1.msra.mxu0 0.0
    %89 = vmatprep.subr.mxu0 0.0
    %90 = vmatpush1.msra.mxu0 0.0
    %91 = vmatprep.subr.mxu0 0.0
    %92 = vmatpush1.msra.mxu0 0.0
    %93 = vmatprep.subr.mxu0 0.0
    %94 = vmatpush1.msra.mxu0 0.0
    %95 = vmatprep.subr.mxu0 0.0
    %96 = vmatpush1.msra.mxu0 0.0
    %97 = vmatprep.subr.mxu0 0.0
    %98 = vmatpush1.msra.mxu0 0.0
    %99 = vmatprep.subr.mxu0 0.0
    %100 = vmatpush1.msra.mxu0 0.0
    %101 = vmatprep.subr.mxu0 0.0
    %102 = vmatpush1.msra.mxu0 0.0
    %103 = vmatprep.subr.mxu0 0.0
    %104 = vmatpush1.msra.mxu0 0.0
    %105 = vmatprep.subr.mxu0 0.0
    %106 = vmatpush1.msra.mxu0 0.0
    %107 = vmatprep.subr.mxu0 0.0
    %108 = vmatpush1.msra.mxu0 0.0
    %109 = vmatprep.subr.mxu0 0.0
    %110 = vmatpush1.msra.mxu0 0.0
    %111 = vmatprep.mubr.f32.mxu0 0.0
    %v112 = vand.u32 %v44, 4294901760
    %v113 = vsub.f32 %v44, %v112
    %v114 = vand.u32 %v113, 4294901760
    %v115 = vsub.f32 %v113, %v114
    %v116 = vand.u32 %v115, 4294901760
    %117 = vmatmul.mubr.f32.gmra.mrb[0].mxu0 %v116
    %v118 = vpop.f32.mrb[0].mxu0
    %v119 = vadd.f32 0.0, %v118
    %v120 = vpop.f32.mrb[0].mxu0
    %121 = vdwg.mxu0
    %122 = vmatprep.subr.mxu0 0.0
    %v123 = vand.u32 %v36, 4294901760
    %v124 = vsub.f32 %v36, %v123
    %v125 = vand.u32 %v124, 4294901760
    %v126 = vsub.f32 %v124, %v125
    %v127 = vand.u32 %v126, 4294901760
    %128 = vmatpush1.msra.mxu0 %v127
    %129 = vmatprep.subr.mxu0 0.0
    %130 = vmatpush1.msra.mxu0 0.0
    %131 = vmatprep.subr.mxu0 0.0
    %132 = vmatpush1.msra.mxu0 0.0
    %133 = vmatprep.subr.mxu0 0.0
    %134 = vmatpush1.msra.mxu0 0.0
    %135 = vmatprep.subr.mxu0 0.0
    %136 = vmatpush1.msra.mxu0 0.0
    %137 = vmatprep.subr.mxu0 0.0
    %138 = vmatpush1.msra.mxu0 0.0
    %139 = vmatprep.subr.mxu0 0.0
    %140 = vmatpush1.msra.mxu0 0.0
    %141 = vmatprep.subr.mxu0 0.0
    %142 = vmatpush1.msra.mxu0 0.0
    %143 = vmatprep.subr.mxu0 0.0
    %144 = vmatpush1.msra.mxu0 0.0
    %145 = vmatprep.subr.mxu0 0.0
    %146 = vmatpush1.msra.mxu0 0.0
    %147 = vmatprep.subr.mxu0 0.0
    %148 = vmatpush1.msra.mxu0 0.0
    %149 = vmatprep.subr.mxu0 0.0
    %150 = vmatpush1.msra.mxu0 0.0
    %151 = vmatprep.subr.mxu0 0.0
    %152 = vmatpush1.msra.mxu0 0.0
    %153 = vmatprep.subr.mxu0 0.0
    %154 = vmatpush1.msra.mxu0 0.0
    %155 = vmatprep.subr.mxu0 0.0
    %156 = vmatpush1.msra.mxu0 0.0
    %157 = vmatprep.subr.mxu0 0.0
    %158 = vmatpush1.msra.mxu0 0.0
    %159 = vmatprep.subr.mxu0 0.0
    %160 = vmatpush1.msra.mxu0 0.0
    %161 = vmatprep.subr.mxu0 0.0
    %162 = vmatpush1.msra.mxu0 0.0
    %163 = vmatprep.subr.mxu0 0.0
    %164 = vmatpush1.msra.mxu0 0.0
    %165 = vmatprep.subr.mxu0 0.0
    %166 = vmatpush1.msra.mxu0 0.0
    %167 = vmatprep.subr.mxu0 0.0
    %168 = vmatpush1.msra.mxu0 0.0
    %169 = vmatprep.subr.mxu0 0.0
    %170 = vmatpush1.msra.mxu0 0.0
    %171 = vmatprep.subr.mxu0 0.0
    %172 = vmatpush1.msra.mxu0 0.0
    %173 = vmatprep.subr.mxu0 0.0
    %174 = vmatpush1.msra.mxu0 0.0
    %175 = vmatprep.subr.mxu0 0.0
    %176 = vmatpush1.msra.mxu0 0.0
    %177 = vmatprep.subr.mxu0 0.0
    %178 = vmatpush1.msra.mxu0 0.0
    %179 = vmatprep.subr.mxu0 0.0
    %180 = vmatpush1.msra.mxu0 0.0
    %181 = vmatprep.subr.mxu0 0.0
    %182 = vmatpush1.msra.mxu0 0.0
    %183 = vmatprep.subr.mxu0 0.0
    %184 = vmatpush1.msra.mxu0 0.0
    %185 = vmatprep.subr.mxu0 0.0
    %186 = vmatpush1.msra.mxu0 0.0
    %187 = vmatprep.subr.mxu0 0.0
    %188 = vmatpush1.msra.mxu0 0.0
    %189 = vmatprep.subr.mxu0 0.0
    %190 = vmatpush1.msra.mxu0 0.0
    %191 = vmatprep.mubr.f32.mxu0 0.0
    %v192 = vand.u32 %v44, 4294901760
    %193 = vmatmul.mubr.f32.gmra.mrb[0].mxu0 %v192
    %v194 = vpop.f32.mrb[0].mxu0
    %v195 = vadd.f32 %v119, %v194
    %v196 = vpop.f32.mrb[0].mxu0
    %197 = vdwg.mxu0
    %198 = vmatprep.subr.mxu0 0.0
    %v199 = vand.u32 %v36, 4294901760
    %v200 = vsub.f32 %v36, %v199
    %201 = vmatpush1.msra.mxu0 %v200
    %202 = vmatprep.subr.mxu0 0.0
    %203 = vmatpush1.msra.mxu0 0.0
    %204 = vmatprep.subr.mxu0 0.0
    %205 = vmatpush1.msra.mxu0 0.0
    %206 = vmatprep.subr.mxu0 0.0
    %207 = vmatpush1.msra.mxu0 0.0
    %208 = vmatprep.subr.mxu0 0.0
    %209 = vmatpush1.msra.mxu0 0.0
    %210 = vmatprep.subr.mxu0 0.0
    %211 = vmatpush1.msra.mxu0 0.0
    %212 = vmatprep.subr.mxu0 0.0
    %213 = vmatpush1.msra.mxu0 0.0
    %214 = vmatprep.subr.mxu0 0.0
    %215 = vmatpush1.msra.mxu0 0.0
    %216 = vmatprep.subr.mxu0 0.0
    %217 = vmatpush1.msra.mxu0 0.0
    %218 = vmatprep.subr.mxu0 0.0
    %219 = vmatpush1.msra.mxu0 0.0
    %220 = vmatprep.subr.mxu0 0.0
    %221 = vmatpush1.msra.mxu0 0.0
    %222 = vmatprep.subr.mxu0 0.0
    %223 = vmatpush1.msra.mxu0 0.0
    %224 = vmatprep.subr.mxu0 0.0
    %225 = vmatpush1.msra.mxu0 0.0
    %226 = vmatprep.subr.mxu0 0.0
    %227 = vmatpush1.msra.mxu0 0.0
    %228 = vmatprep.subr.mxu0 0.0
    %229 = vmatpush1.msra.mxu0 0.0
    %230 = vmatprep.subr.mxu0 0.0
    %231 = vmatpush1.msra.mxu0 0.0
    %232 = vmatprep.subr.mxu0 0.0
    %233 = vmatpush1.msra.mxu0 0.0
    %234 = vmatprep.subr.mxu0 0.0
    %235 = vmatpush1.msra.mxu0 0.0
    %236 = vmatprep.subr.mxu0 0.0
    %237 = vmatpush1.msra.mxu0 0.0
    %238 = vmatprep.subr.mxu0 0.0
    %239 = vmatpush1.msra.mxu0 0.0
    %240 = vmatprep.subr.mxu0 0.0
    %241 = vmatpush1.msra.mxu0 0.0
    %242 = vmatprep.subr.mxu0 0.0
    %243 = vmatpush1.msra.mxu0 0.0
    %244 = vmatprep.subr.mxu0 0.0
    %245 = vmatpush1.msra.mxu0 0.0
    %246 = vmatprep.subr.mxu0 0.0
    %247 = vmatpush1.msra.mxu0 0.0
    %248 = vmatprep.subr.mxu0 0.0
    %249 = vmatpush1.msra.mxu0 0.0
    %250 = vmatprep.subr.mxu0 0.0
    %251 = vmatpush1.msra.mxu0 0.0
    %252 = vmatprep.subr.mxu0 0.0
    %253 = vmatpush1.msra.mxu0 0.0
    %254 = vmatprep.subr.mxu0 0.0
    %255 = vmatpush1.msra.mxu0 0.0
    %256 = vmatprep.subr.mxu0 0.0
    %257 = vmatpush1.msra.mxu0 0.0
    %258 = vmatprep.subr.mxu0 0.0
    %259 = vmatpush1.msra.mxu0 0.0
    %260 = vmatprep.subr.mxu0 0.0
    %261 = vmatpush1.msra.mxu0 0.0
    %262 = vmatprep.subr.mxu0 0.0
    %263 = vmatpush1.msra.mxu0 0.0
    %264 = vmatprep.mubr.f32.mxu0 0.0
    %v265 = vand.u32 %v44, 4294901760
    %v266 = vsub.f32 %v44, %v265
    %267 = vmatmul.mubr.f32.gmra.mrb[0].mxu0 %v266
    %v268 = vpop.f32.mrb[0].mxu0
    %v269 = vadd.f32 %v195, %v268
    %v270 = vpop.f32.mrb[0].mxu0
    %271 = vdwg.mxu0
    %272 = vmatprep.subr.mxu0 0.0
    %v273 = vand.u32 %v36, 4294901760
    %274 = vmatpush1.msra.mxu0 %v273
    %275 = vmatprep.subr.mxu0 0.0
    %276 = vmatpush1.msra.mxu0 0.0
    %277 = vmatprep.subr.mxu0 0.0
    %278 = vmatpush1.msra.mxu0 0.0
    %279 = vmatprep.subr.mxu0 0.0
    %280 = vmatpush1.msra.mxu0 0.0
    %281 = vmatprep.subr.mxu0 0.0
    %282 = vmatpush1.msra.mxu0 0.0
    %283 = vmatprep.subr.mxu0 0.0
    %284 = vmatpush1.msra.mxu0 0.0
    %285 = vmatprep.subr.mxu0 0.0
    %286 = vmatpush1.msra.mxu0 0.0
    %287 = vmatprep.subr.mxu0 0.0
    %288 = vmatpush1.msra.mxu0 0.0
    %289 = vmatprep.subr.mxu0 0.0
    %290 = vmatpush1.msra.mxu0 0.0
    %291 = vmatprep.subr.mxu0 0.0
    %292 = vmatpush1.msra.mxu0 0.0
    %293 = vmatprep.subr.mxu0 0.0
    %294 = vmatpush1.msra.mxu0 0.0
    %295 = vmatprep.subr.mxu0 0.0
    %296 = vmatpush1.msra.mxu0 0.0
    %297 = vmatprep.subr.mxu0 0.0
    %298 = vmatpush1.msra.mxu0 0.0
    %299 = vmatprep.subr.mxu0 0.0
    %300 = vmatpush1.msra.mxu0 0.0
    %301 = vmatprep.subr.mxu0 0.0
    %302 = vmatpush1.msra.mxu0 0.0
    %303 = vmatprep.subr.mxu0 0.0
    %304 = vmatpush1.msra.mxu0 0.0
    %305 = vmatprep.subr.mxu0 0.0
    %306 = vmatpush1.msra.mxu0 0.0
    %307 = vmatprep.subr.mxu0 0.0
    %308 = vmatpush1.msra.mxu0 0.0
    %309 = vmatprep.subr.mxu0 0.0
    %310 = vmatpush1.msra.mxu0 0.0
    %311 = vmatprep.subr.mxu0 0.0
    %312 = vmatpush1.msra.mxu0 0.0
    %313 = vmatprep.subr.mxu0 0.0
    %314 = vmatpush1.msra.mxu0 0.0
    %315 = vmatprep.subr.mxu0 0.0
    %316 = vmatpush1.msra.mxu0 0.0
    %317 = vmatprep.subr.mxu0 0.0
    %318 = vmatpush1.msra.mxu0 0.0
    %319 = vmatprep.subr.mxu0 0.0
    %320 = vmatpush1.msra.mxu0 0.0
    %321 = vmatprep.subr.mxu0 0.0
    %322 = vmatpush1.msra.mxu0 0.0
    %323 = vmatprep.subr.mxu0 0.0
    %324 = vmatpush1.msra.mxu0 0.0
    %325 = vmatprep.subr.mxu0 0.0
    %326 = vmatpush1.msra.mxu0 0.0
    %327 = vmatprep.subr.mxu0 0.0
    %328 = vmatpush1.msra.mxu0 0.0
    %329 = vmatprep.subr.mxu0 0.0
    %330 = vmatpush1.msra.mxu0 0.0
    %331 = vmatprep.subr.mxu0 0.0
    %332 = vmatpush1.msra.mxu0 0.0
    %333 = vmatprep.subr.mxu0 0.0
    %334 = vmatpush1.msra.mxu0 0.0
    %335 = vmatprep.subr.mxu0 0.0
    %336 = vmatpush1.msra.mxu0 0.0
    %337 = vmatprep.mubr.f32.mxu0 0.0
    %v338 = vand.u32 %v44, 4294901760
    %v339 = vsub.f32 %v44, %v338
    %v340 = vand.u32 %v339, 4294901760
    %341 = vmatmul.mubr.f32.gmra.mrb[0].mxu0 %v340
    %v342 = vpop.f32.mrb[0].mxu0
    %v343 = vadd.f32 %v269, %v342
    %v344 = vpop.f32.mrb[0].mxu0
    %345 = vdwg.mxu0
    %346 = vmatprep.subr.mxu0 0.0
    %v347 = vand.u32 %v36, 4294901760
    %v348 = vsub.f32 %v36, %v347
    %v349 = vand.u32 %v348, 4294901760
    %350 = vmatpush1.msra.mxu0 %v349
    %351 = vmatprep.subr.mxu0 0.0
    %352 = vmatpush1.msra.mxu0 0.0
    %353 = vmatprep.subr.mxu0 0.0
    %354 = vmatpush1.msra.mxu0 0.0
    %355 = vmatprep.subr.mxu0 0.0
    %356 = vmatpush1.msra.mxu0 0.0
    %357 = vmatprep.subr.mxu0 0.0
    %358 = vmatpush1.msra.mxu0 0.0
    %359 = vmatprep.subr.mxu0 0.0
    %360 = vmatpush1.msra.mxu0 0.0
    %361 = vmatprep.subr.mxu0 0.0
    %362 = vmatpush1.msra.mxu0 0.0
    %363 = vmatprep.subr.mxu0 0.0
    %364 = vmatpush1.msra.mxu0 0.0
    %365 = vmatprep.subr.mxu0 0.0
    %366 = vmatpush1.msra.mxu0 0.0
    %367 = vmatprep.subr.mxu0 0.0
    %368 = vmatpush1.msra.mxu0 0.0
    %369 = vmatprep.subr.mxu0 0.0
    %370 = vmatpush1.msra.mxu0 0.0
    %371 = vmatprep.subr.mxu0 0.0
    %372 = vmatpush1.msra.mxu0 0.0
    %373 = vmatprep.subr.mxu0 0.0
    %374 = vmatpush1.msra.mxu0 0.0
    %375 = vmatprep.subr.mxu0 0.0
    %376 = vmatpush1.msra.mxu0 0.0
    %377 = vmatprep.subr.mxu0 0.0
    %378 = vmatpush1.msra.mxu0 0.0
    %379 = vmatprep.subr.mxu0 0.0
    %380 = vmatpush1.msra.mxu0 0.0
    %381 = vmatprep.subr.mxu0 0.0
    %382 = vmatpush1.msra.mxu0 0.0
    %383 = vmatprep.subr.mxu0 0.0
    %384 = vmatpush1.msra.mxu0 0.0
    %385 = vmatprep.subr.mxu0 0.0
    %386 = vmatpush1.msra.mxu0 0.0
    %387 = vmatprep.subr.mxu0 0.0
    %388 = vmatpush1.msra.mxu0 0.0
    %389 = vmatprep.subr.mxu0 0.0
    %390 = vmatpush1.msra.mxu0 0.0
    %391 = vmatprep.subr.mxu0 0.0
    %392 = vmatpush1.msra.mxu0 0.0
    %393 = vmatprep.subr.mxu0 0.0
    %394 = vmatpush1.msra.mxu0 0.0
    %395 = vmatprep.subr.mxu0 0.0
    %396 = vmatpush1.msra.mxu0 0.0
    %397 = vmatprep.subr.mxu0 0.0
    %398 = vmatpush1.msra.mxu0 0.0
    %399 = vmatprep.subr.mxu0 0.0
    %400 = vmatpush1.msra.mxu0 0.0
    %401 = vmatprep.subr.mxu0 0.0
    %402 = vmatpush1.msra.mxu0 0.0
    %403 = vmatprep.subr.mxu0 0.0
    %404 = vmatpush1.msra.mxu0 0.0
    %405 = vmatprep.subr.mxu0 0.0
    %406 = vmatpush1.msra.mxu0 0.0
    %407 = vmatprep.subr.mxu0 0.0
    %408 = vmatpush1.msra.mxu0 0.0
    %409 = vmatprep.subr.mxu0 0.0
    %410 = vmatpush1.msra.mxu0 0.0
    %411 = vmatprep.subr.mxu0 0.0
    %412 = vmatpush1.msra.mxu0 0.0
    %413 = vmatprep.mubr.f32.mxu0 0.0
    %v414 = vand.u32 %v44, 4294901760
    %415 = vmatmul.mubr.f32.gmra.mrb[0].mxu0 %v414
    %v416 = vpop.f32.mrb[0].mxu0
    %v417 = vadd.f32 %v343, %v416
    %v418 = vpop.f32.mrb[0].mxu0
    %419 = vdwg.mxu0
    %420 = vmatprep.subr.mxu0 0.0
    %v421 = vand.u32 %v36, 4294901760
    %422 = vmatpush1.msra.mxu0 %v421
    %423 = vmatprep.subr.mxu0 0.0
    %424 = vmatpush1.msra.mxu0 0.0
    %425 = vmatprep.subr.mxu0 0.0
    %426 = vmatpush1.msra.mxu0 0.0
    %427 = vmatprep.subr.mxu0 0.0
    %428 = vmatpush1.msra.mxu0 0.0
    %429 = vmatprep.subr.mxu0 0.0
    %430 = vmatpush1.msra.mxu0 0.0
    %431 = vmatprep.subr.mxu0 0.0
    %432 = vmatpush1.msra.mxu0 0.0
    %433 = vmatprep.subr.mxu0 0.0
    %434 = vmatpush1.msra.mxu0 0.0
    %435 = vmatprep.subr.mxu0 0.0
    %436 = vmatpush1.msra.mxu0 0.0
    %437 = vmatprep.subr.mxu0 0.0
    %438 = vmatpush1.msra.mxu0 0.0
    %439 = vmatprep.subr.mxu0 0.0
    %440 = vmatpush1.msra.mxu0 0.0
    %441 = vmatprep.subr.mxu0 0.0
    %442 = vmatpush1.msra.mxu0 0.0
    %443 = vmatprep.subr.mxu0 0.0
    %444 = vmatpush1.msra.mxu0 0.0
    %445 = vmatprep.subr.mxu0 0.0
    %446 = vmatpush1.msra.mxu0 0.0
    %447 = vmatprep.subr.mxu0 0.0
    %448 = vmatpush1.msra.mxu0 0.0
    %449 = vmatprep.subr.mxu0 0.0
    %450 = vmatpush1.msra.mxu0 0.0
    %451 = vmatprep.subr.mxu0 0.0
    %452 = vmatpush1.msra.mxu0 0.0
    %453 = vmatprep.subr.mxu0 0.0
    %454 = vmatpush1.msra.mxu0 0.0
    %455 = vmatprep.subr.mxu0 0.0
    %456 = vmatpush1.msra.mxu0 0.0
    %457 = vmatprep.subr.mxu0 0.0
    %458 = vmatpush1.msra.mxu0 0.0
    %459 = vmatprep.subr.mxu0 0.0
    %460 = vmatpush1.msra.mxu0 0.0
    %461 = vmatprep.subr.mxu0 0.0
    %462 = vmatpush1.msra.mxu0 0.0
    %463 = vmatprep.subr.mxu0 0.0
    %464 = vmatpush1.msra.mxu0 0.0
    %465 = vmatprep.subr.mxu0 0.0
    %466 = vmatpush1.msra.mxu0 0.0
    %467 = vmatprep.subr.mxu0 0.0
    %468 = vmatpush1.msra.mxu0 0.0
    %469 = vmatprep.subr.mxu0 0.0
    %470 = vmatpush1.msra.mxu0 0.0
    %471 = vmatprep.subr.mxu0 0.0
    %472 = vmatpush1.msra.mxu0 0.0
    %473 = vmatprep.subr.mxu0 0.0
    %474 = vmatpush1.msra.mxu0 0.0
    %475 = vmatprep.subr.mxu0 0.0
    %476 = vmatpush1.msra.mxu0 0.0
    %477 = vmatprep.subr.mxu0 0.0
    %478 = vmatpush1.msra.mxu0 0.0
    %479 = vmatprep.subr.mxu0 0.0
    %480 = vmatpush1.msra.mxu0 0.0
    %481 = vmatprep.subr.mxu0 0.0
    %482 = vmatpush1.msra.mxu0 0.0
    %483 = vmatprep.subr.mxu0 0.0
    %484 = vmatpush1.msra.mxu0 0.0
    %485 = vmatprep.mubr.f32.mxu0 0.0
    %v486 = vand.u32 %v44, 4294901760
    %487 = vmatmul.mubr.f32.gmra.mrb[0].mxu0 %v486
    %v488 = vpop.f32.mrb[0].mxu0
    %v489 = vadd.f32 %v417, %v488
    %v490 = vpop.f32.mrb[0].mxu0
    %491 = vdwg.mxu0
    %v493 = vsel %vm42, %v39, 0
    %495 = vmatprep.subr.mxu0 0.0
    %v496 = vand.u32 %v37, 4294901760
    %497 = vmatpush1.msra.mxu0 %v496
    %498 = vmatprep.subr.mxu0 0.0
    %499 = vmatpush1.msra.mxu0 0.0
    %500 = vmatprep.subr.mxu0 0.0
    %501 = vmatpush1.msra.mxu0 0.0
    %502 = vmatprep.subr.mxu0 0.0
    %503 = vmatpush1.msra.mxu0 0.0
    %504 = vmatprep.subr.mxu0 0.0
    %505 = vmatpush1.msra.mxu0 0.0
    %506 = vmatprep.subr.mxu0 0.0
    %507 = vmatpush1.msra.mxu0 0.0
    %508 = vmatprep.subr.mxu0 0.0
    %509 = vmatpush1.msra.mxu0 0.0
    %510 = vmatprep.subr.mxu0 0.0
    %511 = vmatpush1.msra.mxu0 0.0
    %512 = vmatprep.subr.mxu0 0.0
    %513 = vmatpush1.msra.mxu0 0.0
    %514 = vmatprep.subr.mxu0 0.0
    %515 = vmatpush1.msra.mxu0 0.0
    %516 = vmatprep.subr.mxu0 0.0
    %517 = vmatpush1.msra.mxu0 0.0
    %518 = vmatprep.subr.mxu0 0.0
    %519 = vmatpush1.msra.mxu0 0.0
    %520 = vmatprep.subr.mxu0 0.0
    %521 = vmatpush1.msra.mxu0 0.0
    %522 = vmatprep.subr.mxu0 0.0
    %523 = vmatpush1.msra.mxu0 0.0
    %524 = vmatprep.subr.mxu0 0.0
    %525 = vmatpush1.msra.mxu0 0.0
    %526 = vmatprep.subr.mxu0 0.0
    %527 = vmatpush1.msra.mxu0 0.0
    %528 = vmatprep.subr.mxu0 0.0
    %529 = vmatpush1.msra.mxu0 0.0
    %530 = vmatprep.subr.mxu0 0.0
    %531 = vmatpush1.msra.mxu0 0.0
    %532 = vmatprep.subr.mxu0 0.0
    %533 = vmatpush1.msra.mxu0 0.0
    %534 = vmatprep.subr.mxu0 0.0
    %535 = vmatpush1.msra.mxu0 0.0
    %536 = vmatprep.subr.mxu0 0.0
    %537 = vmatpush1.msra.mxu0 0.0
    %538 = vmatprep.subr.mxu0 0.0
    %539 = vmatpush1.msra.mxu0 0.0
    %540 = vmatprep.subr.mxu0 0.0
    %541 = vmatpush1.msra.mxu0 0.0
    %542 = vmatprep.subr.mxu0 0.0
    %543 = vmatpush1.msra.mxu0 0.0
    %544 = vmatprep.subr.mxu0 0.0
    %545 = vmatpush1.msra.mxu0 0.0
    %546 = vmatprep.subr.mxu0 0.0
    %547 = vmatpush1.msra.mxu0 0.0
    %548 = vmatprep.subr.mxu0 0.0
    %549 = vmatpush1.msra.mxu0 0.0
    %550 = vmatprep.subr.mxu0 0.0
    %551 = vmatpush1.msra.mxu0 0.0
    %552 = vmatprep.subr.mxu0 0.0
    %553 = vmatpush1.msra.mxu0 0.0
    %554 = vmatprep.subr.mxu0 0.0
    %555 = vmatpush1.msra.mxu0 0.0
    %556 = vmatprep.subr.mxu0 0.0
    %557 = vmatpush1.msra.mxu0 0.0
    %558 = vmatprep.subr.mxu0 0.0
    %559 = vmatpush1.msra.mxu0 0.0
    %560 = vmatprep.mubr.f32.mxu0 0.0
    %v561 = vand.u32 %v493, 4294901760
    %v562 = vsub.f32 %v493, %v561
    %v563 = vand.u32 %v562, 4294901760
    %v564 = vsub.f32 %v562, %v563
    %v565 = vand.u32 %v564, 4294901760
    %566 = vmatmul.mubr.f32.gmra.mrb[0].mxu0 %v565
    %v567 = vpop.f32.mrb[0].mxu0
    %v568 = vadd.f32 0.0, %v567
    %v569 = vpop.f32.mrb[0].mxu0
    %570 = vdwg.mxu0
    %571 = vmatprep.subr.mxu0 0.0
    %v572 = vand.u32 %v37, 4294901760
    %v573 = vsub.f32 %v37, %v572
    %v574 = vand.u32 %v573, 4294901760
    %v575 = vsub.f32 %v573, %v574
    %v576 = vand.u32 %v575, 4294901760
    %577 = vmatpush1.msra.mxu0 %v576
    %578 = vmatprep.subr.mxu0 0.0
    %579 = vmatpush1.msra.mxu0 0.0
    %580 = vmatprep.subr.mxu0 0.0
    %581 = vmatpush1.msra.mxu0 0.0
    %582 = vmatprep.subr.mxu0 0.0
    %583 = vmatpush1.msra.mxu0 0.0
    %584 = vmatprep.subr.mxu0 0.0
    %585 = vmatpush1.msra.mxu0 0.0
    %586 = vmatprep.subr.mxu0 0.0
    %587 = vmatpush1.msra.mxu0 0.0
    %588 = vmatprep.subr.mxu0 0.0
    %589 = vmatpush1.msra.mxu0 0.0
    %590 = vmatprep.subr.mxu0 0.0
    %591 = vmatpush1.msra.mxu0 0.0
    %592 = vmatprep.subr.mxu0 0.0
    %593 = vmatpush1.msra.mxu0 0.0
    %594 = vmatprep.subr.mxu0 0.0
    %595 = vmatpush1.msra.mxu0 0.0
    %596 = vmatprep.subr.mxu0 0.0
    %597 = vmatpush1.msra.mxu0 0.0
    %598 = vmatprep.subr.mxu0 0.0
    %599 = vmatpush1.msra.mxu0 0.0
    %600 = vmatprep.subr.mxu0 0.0
    %601 = vmatpush1.msra.mxu0 0.0
    %602 = vmatprep.subr.mxu0 0.0
    %603 = vmatpush1.msra.mxu0 0.0
    %604 = vmatprep.subr.mxu0 0.0
    %605 = vmatpush1.msra.mxu0 0.0
    %606 = vmatprep.subr.mxu0 0.0
    %607 = vmatpush1.msra.mxu0 0.0
    %608 = vmatprep.subr.mxu0 0.0
    %609 = vmatpush1.msra.mxu0 0.0
    %610 = vmatprep.subr.mxu0 0.0
    %611 = vmatpush1.msra.mxu0 0.0
    %612 = vmatprep.subr.mxu0 0.0
    %613 = vmatpush1.msra.mxu0 0.0
    %614 = vmatprep.subr.mxu0 0.0
    %615 = vmatpush1.msra.mxu0 0.0
    %616 = vmatprep.subr.mxu0 0.0
    %617 = vmatpush1.msra.mxu0 0.0
    %618 = vmatprep.subr.mxu0 0.0
    %619 = vmatpush1.msra.mxu0 0.0
    %620 = vmatprep.subr.mxu0 0.0
    %621 = vmatpush1.msra.mxu0 0.0
    %622 = vmatprep.subr.mxu0 0.0
    %623 = vmatpush1.msra.mxu0 0.0
    %624 = vmatprep.subr.mxu0 0.0
    %625 = vmatpush1.msra.mxu0 0.0
    %626 = vmatprep.subr.mxu0 0.0
    %627 = vmatpush1.msra.mxu0 0.0
    %628 = vmatprep.subr.mxu0 0.0
    %629 = vmatpush1.msra.mxu0 0.0
    %630 = vmatprep.subr.mxu0 0.0
    %631 = vmatpush1.msra.mxu0 0.0
    %632 = vmatprep.subr.mxu0 0.0
    %633 = vmatpush1.msra.mxu0 0.0
    %634 = vmatprep.subr.mxu0 0.0
    %635 = vmatpush1.msra.mxu0 0.0
    %636 = vmatprep.subr.mxu0 0.0
    %637 = vmatpush1.msra.mxu0 0.0
    %638 = vmatprep.subr.mxu0 0.0
    %639 = vmatpush1.msra.mxu0 0.0
    %640 = vmatprep.mubr.f32.mxu0 0.0
    %v641 = vand.u32 %v493, 4294901760
    %642 = vmatmul.mubr.f32.gmra.mrb[0].mxu0 %v641
    %v643 = vpop.f32.mrb[0].mxu0
    %v644 = vadd.f32 %v568, %v643
    %v645 = vpop.f32.mrb[0].mxu0
    %646 = vdwg.mxu0
    %647 = vmatprep.subr.mxu0 0.0
    %v648 = vand.u32 %v37, 4294901760
    %v649 = vsub.f32 %v37, %v648
    %650 = vmatpush1.msra.mxu0 %v649
    %651 = vmatprep.subr.mxu0 0.0
    %652 = vmatpush1.msra.mxu0 0.0
    %653 = vmatprep.subr.mxu0 0.0
    %654 = vmatpush1.msra.mxu0 0.0
    %655 = vmatprep.subr.mxu0 0.0
    %656 = vmatpush1.msra.mxu0 0.0
    %657 = vmatprep.subr.mxu0 0.0
    %658 = vmatpush1.msra.mxu0 0.0
    %659 = vmatprep.subr.mxu0 0.0
    %660 = vmatpush1.msra.mxu0 0.0
    %661 = vmatprep.subr.mxu0 0.0
    %662 = vmatpush1.msra.mxu0 0.0
    %663 = vmatprep.subr.mxu0 0.0
    %664 = vmatpush1.msra.mxu0 0.0
    %665 = vmatprep.subr.mxu0 0.0
    %666 = vmatpush1.msra.mxu0 0.0
    %667 = vmatprep.subr.mxu0 0.0
    %668 = vmatpush1.msra.mxu0 0.0
    %669 = vmatprep.subr.mxu0 0.0
    %670 = vmatpush1.msra.mxu0 0.0
    %671 = vmatprep.subr.mxu0 0.0
    %672 = vmatpush1.msra.mxu0 0.0
    %673 = vmatprep.subr.mxu0 0.0
    %674 = vmatpush1.msra.mxu0 0.0
    %675 = vmatprep.subr.mxu0 0.0
    %676 = vmatpush1.msra.mxu0 0.0
    %677 = vmatprep.subr.mxu0 0.0
    %678 = vmatpush1.msra.mxu0 0.0
    %679 = vmatprep.subr.mxu0 0.0
    %680 = vmatpush1.msra.mxu0 0.0
    %681 = vmatprep.subr.mxu0 0.0
    %682 = vmatpush1.msra.mxu0 0.0
    %683 = vmatprep.subr.mxu0 0.0
    %684 = vmatpush1.msra.mxu0 0.0
    %685 = vmatprep.subr.mxu0 0.0
    %686 = vmatpush1.msra.mxu0 0.0
    %687 = vmatprep.subr.mxu0 0.0
    %688 = vmatpush1.msra.mxu0 0.0
    %689 = vmatprep.subr.mxu0 0.0
    %690 = vmatpush1.msra.mxu0 0.0
    %691 = vmatprep.subr.mxu0 0.0
    %692 = vmatpush1.msra.mxu0 0.0
    %693 = vmatprep.subr.mxu0 0.0
    %694 = vmatpush1.msra.mxu0 0.0
    %695 = vmatprep.subr.mxu0 0.0
    %696 = vmatpush1.msra.mxu0 0.0
    %697 = vmatprep.subr.mxu0 0.0
    %698 = vmatpush1.msra.mxu0 0.0
    %699 = vmatprep.subr.mxu0 0.0
    %700 = vmatpush1.msra.mxu0 0.0
    %701 = vmatprep.subr.mxu0 0.0
    %702 = vmatpush1.msra.mxu0 0.0
    %703 = vmatprep.subr.mxu0 0.0
    %704 = vmatpush1.msra.mxu0 0.0
    %705 = vmatprep.subr.mxu0 0.0
    %706 = vmatpush1.msra.mxu0 0.0
    %707 = vmatprep.subr.mxu0 0.0
    %708 = vmatpush1.msra.mxu0 0.0
    %709 = vmatprep.subr.mxu0 0.0
    %710 = vmatpush1.msra.mxu0 0.0
    %711 = vmatprep.subr.mxu0 0.0
    %712 = vmatpush1.msra.mxu0 0.0
    %713 = vmatprep.mubr.f32.mxu0 0.0
    %v714 = vand.u32 %v493, 4294901760
    %v715 = vsub.f32 %v493, %v714
    %716 = vmatmul.mubr.f32.gmra.mrb[0].mxu0 %v715
    %v717 = vpop.f32.mrb[0].mxu0
    %v718 = vadd.f32 %v644, %v717
    %v719 = vpop.f32.mrb[0].mxu0
    %720 = vdwg.mxu0
    %721 = vmatprep.subr.mxu0 0.0
    %v722 = vand.u32 %v37, 4294901760
    %723 = vmatpush1.msra.mxu0 %v722
    %724 = vmatprep.subr.mxu0 0.0
    %725 = vmatpush1.msra.mxu0 0.0
    %726 = vmatprep.subr.mxu0 0.0
    %727 = vmatpush1.msra.mxu0 0.0
    %728 = vmatprep.subr.mxu0 0.0
    %729 = vmatpush1.msra.mxu0 0.0
    %730 = vmatprep.subr.mxu0 0.0
    %731 = vmatpush1.msra.mxu0 0.0
    %732 = vmatprep.subr.mxu0 0.0
    %733 = vmatpush1.msra.mxu0 0.0
    %734 = vmatprep.subr.mxu0 0.0
    %735 = vmatpush1.msra.mxu0 0.0
    %736 = vmatprep.subr.mxu0 0.0
    %737 = vmatpush1.msra.mxu0 0.0
    %738 = vmatprep.subr.mxu0 0.0
    %739 = vmatpush1.msra.mxu0 0.0
    %740 = vmatprep.subr.mxu0 0.0
    %741 = vmatpush1.msra.mxu0 0.0
    %742 = vmatprep.subr.mxu0 0.0
    %743 = vmatpush1.msra.mxu0 0.0
    %744 = vmatprep.subr.mxu0 0.0
    %745 = vmatpush1.msra.mxu0 0.0
    %746 = vmatprep.subr.mxu0 0.0
    %747 = vmatpush1.msra.mxu0 0.0
    %748 = vmatprep.subr.mxu0 0.0
    %749 = vmatpush1.msra.mxu0 0.0
    %750 = vmatprep.subr.mxu0 0.0
    %751 = vmatpush1.msra.mxu0 0.0
    %752 = vmatprep.subr.mxu0 0.0
    %753 = vmatpush1.msra.mxu0 0.0
    %754 = vmatprep.subr.mxu0 0.0
    %755 = vmatpush1.msra.mxu0 0.0
    %756 = vmatprep.subr.mxu0 0.0
    %757 = vmatpush1.msra.mxu0 0.0
    %758 = vmatprep.subr.mxu0 0.0
    %759 = vmatpush1.msra.mxu0 0.0
    %760 = vmatprep.subr.mxu0 0.0
    %761 = vmatpush1.msra.mxu0 0.0
    %762 = vmatprep.subr.mxu0 0.0
    %763 = vmatpush1.msra.mxu0 0.0
    %764 = vmatprep.subr.mxu0 0.0
    %765 = vmatpush1.msra.mxu0 0.0
    %766 = vmatprep.subr.mxu0 0.0
    %767 = vmatpush1.msra.mxu0 0.0
    %768 = vmatprep.subr.mxu0 0.0
    %769 = vmatpush1.msra.mxu0 0.0
    %770 = vmatprep.subr.mxu0 0.0
    %771 = vmatpush1.msra.mxu0 0.0
    %772 = vmatprep.subr.mxu0 0.0
    %773 = vmatpush1.msra.mxu0 0.0
    %774 = vmatprep.subr.mxu0 0.0
    %775 = vmatpush1.msra.mxu0 0.0
    %776 = vmatprep.subr.mxu0 0.0
    %777 = vmatpush1.msra.mxu0 0.0
    %778 = vmatprep.subr.mxu0 0.0
    %779 = vmatpush1.msra.mxu0 0.0
    %780 = vmatprep.subr.mxu0 0.0
    %781 = vmatpush1.msra.mxu0 0.0
    %782 = vmatprep.subr.mxu0 0.0
    %783 = vmatpush1.msra.mxu0 0.0
    %784 = vmatprep.subr.mxu0 0.0
    %785 = vmatpush1.msra.mxu0 0.0
    %786 = vmatprep.mubr.f32.mxu0 0.0
    %v787 = vand.u32 %v493, 4294901760
    %v788 = vsub.f32 %v493, %v787
    %v789 = vand.u32 %v788, 4294901760
    %790 = vmatmul.mubr.f32.gmra.mrb[0].mxu0 %v789
    %v791 = vpop.f32.mrb[0].mxu0
    %v792 = vadd.f32 %v718, %v791
    %v793 = vpop.f32.mrb[0].mxu0
    %794 = vdwg.mxu0
    %795 = vmatprep.subr.mxu0 0.0
    %v796 = vand.u32 %v37, 4294901760
    %v797 = vsub.f32 %v37, %v796
    %v798 = vand.u32 %v797, 4294901760
    %799 = vmatpush1.msra.mxu0 %v798
    %800 = vmatprep.subr.mxu0 0.0
    %801 = vmatpush1.msra.mxu0 0.0
    %802 = vmatprep.subr.mxu0 0.0
    %803 = vmatpush1.msra.mxu0 0.0
    %804 = vmatprep.subr.mxu0 0.0
    %805 = vmatpush1.msra.mxu0 0.0
    %806 = vmatprep.subr.mxu0 0.0
    %807 = vmatpush1.msra.mxu0 0.0
    %808 = vmatprep.subr.mxu0 0.0
    %809 = vmatpush1.msra.mxu0 0.0
    %810 = vmatprep.subr.mxu0 0.0
    %811 = vmatpush1.msra.mxu0 0.0
    %812 = vmatprep.subr.mxu0 0.0
    %813 = vmatpush1.msra.mxu0 0.0
    %814 = vmatprep.subr.mxu0 0.0
    %815 = vmatpush1.msra.mxu0 0.0
    %816 = vmatprep.subr.mxu0 0.0
    %817 = vmatpush1.msra.mxu0 0.0
    %818 = vmatprep.subr.mxu0 0.0
    %819 = vmatpush1.msra.mxu0 0.0
    %820 = vmatprep.subr.mxu0 0.0
    %821 = vmatpush1.msra.mxu0 0.0
    %822 = vmatprep.subr.mxu0 0.0
    %823 = vmatpush1.msra.mxu0 0.0
    %824 = vmatprep.subr.mxu0 0.0
    %825 = vmatpush1.msra.mxu0 0.0
    %826 = vmatprep.subr.mxu0 0.0
    %827 = vmatpush1.msra.mxu0 0.0
    %828 = vmatprep.subr.mxu0 0.0
    %829 = vmatpush1.msra.mxu0 0.0
    %830 = vmatprep.subr.mxu0 0.0
    %831 = vmatpush1.msra.mxu0 0.0
    %832 = vmatprep.subr.mxu0 0.0
    %833 = vmatpush1.msra.mxu0 0.0
    %834 = vmatprep.subr.mxu0 0.0
    %835 = vmatpush1.msra.mxu0 0.0
    %836 = vmatprep.subr.mxu0 0.0
    %837 = vmatpush1.msra.mxu0 0.0
    %838 = vmatprep.subr.mxu0 0.0
    %839 = vmatpush1.msra.mxu0 0.0
    %840 = vmatprep.subr.mxu0 0.0
    %841 = vmatpush1.msra.mxu0 0.0
    %842 = vmatprep.subr.mxu0 0.0
    %843 = vmatpush1.msra.mxu0 0.0
    %844 = vmatprep.subr.mxu0 0.0
    %845 = vmatpush1.msra.mxu0 0.0
    %846 = vmatprep.subr.mxu0 0.0
    %847 = vmatpush1.msra.mxu0 0.0
    %848 = vmatprep.subr.mxu0 0.0
    %849 = vmatpush1.msra.mxu0 0.0
    %850 = vmatprep.subr.mxu0 0.0
    %851 = vmatpush1.msra.mxu0 0.0
    %852 = vmatprep.subr.mxu0 0.0
    %853 = vmatpush1.msra.mxu0 0.0
    %854 = vmatprep.subr.mxu0 0.0
    %855 = vmatpush1.msra.mxu0 0.0
    %856 = vmatprep.subr.mxu0 0.0
    %857 = vmatpush1.msra.mxu0 0.0
    %858 = vmatprep.subr.mxu0 0.0
    %859 = vmatpush1.msra.mxu0 0.0
    %860 = vmatprep.subr.mxu0 0.0
    %861 = vmatpush1.msra.mxu0 0.0
    %862 = vmatprep.mubr.f32.mxu0 0.0
    %v863 = vand.u32 %v493, 4294901760
    %864 = vmatmul.mubr.f32.gmra.mrb[0].mxu0 %v863
    %v865 = vpop.f32.mrb[0].mxu0
    %v866 = vadd.f32 %v792, %v865
    %v867 = vpop.f32.mrb[0].mxu0
    %868 = vdwg.mxu0
    %869 = vmatprep.subr.mxu0 0.0
    %v870 = vand.u32 %v37, 4294901760
    %871 = vmatpush1.msra.mxu0 %v870
    %872 = vmatprep.subr.mxu0 0.0
    %873 = vmatpush1.msra.mxu0 0.0
    %874 = vmatprep.subr.mxu0 0.0
    %875 = vmatpush1.msra.mxu0 0.0
    %876 = vmatprep.subr.mxu0 0.0
    %877 = vmatpush1.msra.mxu0 0.0
    %878 = vmatprep.subr.mxu0 0.0
    %879 = vmatpush1.msra.mxu0 0.0
    %880 = vmatprep.subr.mxu0 0.0
    %881 = vmatpush1.msra.mxu0 0.0
    %882 = vmatprep.subr.mxu0 0.0
    %883 = vmatpush1.msra.mxu0 0.0
    %884 = vmatprep.subr.mxu0 0.0
    %885 = vmatpush1.msra.mxu0 0.0
    %886 = vmatprep.subr.mxu0 0.0
    %887 = vmatpush1.msra.mxu0 0.0
    %888 = vmatprep.subr.mxu0 0.0
    %889 = vmatpush1.msra.mxu0 0.0
    %890 = vmatprep.subr.mxu0 0.0
    %891 = vmatpush1.msra.mxu0 0.0
    %892 = vmatprep.subr.mxu0 0.0
    %893 = vmatpush1.msra.mxu0 0.0
    %894 = vmatprep.subr.mxu0 0.0
    %895 = vmatpush1.msra.mxu0 0.0
    %896 = vmatprep.subr.mxu0 0.0
    %897 = vmatpush1.msra.mxu0 0.0
    %898 = vmatprep.subr.mxu0 0.0
    %899 = vmatpush1.msra.mxu0 0.0
    %900 = vmatprep.subr.mxu0 0.0
    %901 = vmatpush1.msra.mxu0 0.0
    %902 = vmatprep.subr.mxu0 0.0
    %903 = vmatpush1.msra.mxu0 0.0
    %904 = vmatprep.subr.mxu0 0.0
    %905 = vmatpush1.msra.mxu0 0.0
    %906 = vmatprep.subr.mxu0 0.0
    %907 = vmatpush1.msra.mxu0 0.0
    %908 = vmatprep.subr.mxu0 0.0
    %909 = vmatpush1.msra.mxu0 0.0
    %910 = vmatprep.subr.mxu0 0.0
    %911 = vmatpush1.msra.mxu0 0.0
    %912 = vmatprep.subr.mxu0 0.0
    %913 = vmatpush1.msra.mxu0 0.0
    %914 = vmatprep.subr.mxu0 0.0
    %915 = vmatpush1.msra.mxu0 0.0
    %916 = vmatprep.subr.mxu0 0.0
    %917 = vmatpush1.msra.mxu0 0.0
    %918 = vmatprep.subr.mxu0 0.0
    %919 = vmatpush1.msra.mxu0 0.0
    %920 = vmatprep.subr.mxu0 0.0
    %921 = vmatpush1.msra.mxu0 0.0
    %922 = vmatprep.subr.mxu0 0.0
    %923 = vmatpush1.msra.mxu0 0.0
    %924 = vmatprep.subr.mxu0 0.0
    %925 = vmatpush1.msra.mxu0 0.0
    %926 = vmatprep.subr.mxu0 0.0
    %927 = vmatpush1.msra.mxu0 0.0
    %928 = vmatprep.subr.mxu0 0.0
    %929 = vmatpush1.msra.mxu0 0.0
    %930 = vmatprep.subr.mxu0 0.0
    %931 = vmatpush1.msra.mxu0 0.0
    %932 = vmatprep.subr.mxu0 0.0
    %933 = vmatpush1.msra.mxu0 0.0
    %934 = vmatprep.mubr.f32.mxu0 0.0
    %v935 = vand.u32 %v493, 4294901760
    %936 = vmatmul.mubr.f32.gmra.mrb[0].mxu0 %v935
    %v937 = vpop.f32.mrb[0].mxu0
    %v938 = vadd.f32 %v866, %v937
    %v939 = vpop.f32.mrb[0].mxu0
    %940 = vdwg.mxu0
    %v941 = vadd.f32 %v40, %v489
    %v942 = vadd.f32 %v41, %v938
    %vm943 = vcmask 253952
    %944 = vst.msk [vmem:[#allocation2] sm:$0x1] %vm943, %v941
    %945 = vst.msk [vmem:[#allocation2 + $0x1] sm:$0x1] %vm943, %v942
    // Predicated region
    $region22: #{tpu_custom_call.1} parent=1 // pred_check
      %p946 = pneg %p29
    $region23: #{tpu_custom_call.1} parent=1 // pred_check_branch
      %948 = sbr.rel (%p946) target = $region25
    $region24: #{tpu_custom_call.1} parent=1 // pred_region
      %v949 = vld [vmem:[#allocation2] sm:$0x1]
      %v950 = vld [vmem:[#allocation2 + $0x1] sm:$0x1]
      %v951 = vld [vmem:[%s2] sm:$0x1]
      %v952 = vld [vmem:[%s2 + $0x1] sm:$0x1]
      %954 = vset.pattern.permute.xlu0 0
      %955 = vperm.xlu0 %954, %v951
      %v956 = vpop.permute.xlu0 %955
      %v958 = vlaneseq
      %v959 = vshrl.u32 %v958, 7
      %v960 = vsub.s32 0, %v959
      %v961 = vrot.slane %v956, %v960
      %963 = vset.pattern.permute.xlu0 0
      %964 = vperm.xlu0 %963, %v952
      %v965 = vpop.permute.xlu0 %964
      %v967 = vlaneseq
      %v968 = vshrl.u32 %v967, 7
      %v969 = vsub.s32 0, %v968
      %v970 = vrot.slane %v965, %v969
      %v971 = vmul.f32 %v949, %v961
      %v972 = vmul.f32 %v950, %v970
      %973 = vst.msk [vmem:[#allocation6] sm:$0x1] %vm943, %v971
      %974 = vst.msk [vmem:[#allocation6 + $0x1] sm:$0x1] %vm943, %v972
    $region25: #{tpu_custom_call.1} parent=1 // pred_fallthru
      _
    // Predicated region
    $region26: #{tpu_custom_call.1} parent=1 // pred_check
      _
    $region27: #{tpu_custom_call.1} parent=1 // pred_check_branch
      %976 = sbr.rel (0) target = $region29
    $region28: #{tpu_custom_call.1} parent=1 // pred_region
      %s978 = ssub.s32 32, 32
      %979 = vsyncadd [#allocation5], %s978
      %s980 = sshll.u32 [#allocation6], 4
      %s981 = int_to_ptr.vmem [resolvable:$true] %s980
      %986 = dma.vmem_to_hbm [thread:$0]  %s981, 32, %s3, [#allocation5], 16, 16, 1
    $region29: #{tpu_custom_call.1} parent=1 // pred_fallthru
      _
    // Predicated region
    $region30: #{tpu_custom_call.1} parent=1 // pred_check
      _
    $region31: #{tpu_custom_call.1} parent=1 // pred_check_branch
      %988 = sbr.rel (0) target = $region33
    $region32: #{tpu_custom_call.1} parent=1 // pred_region
      %989 = dma.done [#allocation5], 32
    $region33: #{tpu_custom_call.1} parent=1 // pred_fallthru
      _
    %990 = vsyncpa [#allocation4], 1
    %991 = vsyncpa [#allocation5], 1

</llo_original>
